<compile_context>
chip_gen: v7x
topology: tpu7x:2x2x1
jax: 0.10.0
libtpu: 0.0.40
codegen_flags: <defaults>
</compile_context>

<pallas_src>
import jax
import jax.numpy as jnp
import numpy as np
from jax.experimental import pallas as pl
from jax.experimental.pallas import tpu as pltpu

EPS = 1e-5


def resnet_block_kernel(x_ref, w1_ref, w2_ref, ss_ref, out_ref):
    # x_ref  : (H, W*C)       f32   one image, lane-dense (channels fastest)
    # w1_ref : (3*W*C, W*C)   bf16  conv1 banded block-Toeplitz weight
    # w2_ref : (3*W*C, W*C)   bf16  conv2 banded block-Toeplitz weight
    # ss_ref : (4, W*C)       f32   folded BN tiled over W:
    #                               rows = [scale1, shift1, scale2, shift2]
    # out_ref: (H, W*C)       f32   lane-dense output, single dense store
    H, WC = x_ref.shape

    x = x_ref[...]                                    # f32; reused as residual
    s1, b1 = ss_ref[0:1, :], ss_ref[1:2, :]
    s2, b2 = ss_ref[2:3, :], ss_ref[3:4, :]

    def conv3x3(a, w_ref):
        # a: (H, W*C) f32.  Height taps -> two zero-padded sublane shifts;
        # width taps + channel mixing are encoded in the banded weight matrix,
        # so 'same' zero padding in width falls out of the matmul for free.
        zrow = jnp.zeros((1, WC), a.dtype)
        up = jnp.concatenate([zrow, a[:-1, :]], axis=0)   # a[h-1]  (kh = 0)
        dn = jnp.concatenate([a[1:, :], zrow], axis=0)    # a[h+1]  (kh = 2)
        lhs = jnp.concatenate([up, a, dn], axis=1)        # (H, 3*W*C)
        return jnp.dot(lhs.astype(jnp.bfloat16), w_ref[...],
                       preferred_element_type=jnp.float32)  # (H, W*C) f32

    # conv1 -> BN1 -> ReLU   (lane-dense, f32 on the VPU)
    z = jnp.maximum(conv3x3(x, w1_ref) * s1 + b1, 0.0)
    # conv2 -> BN2 -> + residual -> ReLU, one unmasked (H, W*C) store
    y = conv3x3(z, w2_ref) * s2 + b2
    out_ref[...] = jnp.maximum(y + x, 0.0)


def _banded_conv_weight(w_oihw, W):
    """OIHW (C, C, 3, 3) -> (3*W*C, W*C) bf16 banded block-Toeplitz matrix.

    rows:  kh*(W*Cin) + w_in*Cin + cin  (kh block order matches the kernel's
                                         [a[h-1], a, a[h+1]] lane concat)
    cols:  w_out*Cout + cout
    entry: weight[cout, cin, kh, kw] with kw = w_in - w_out + 1 (0 otherwise),
    which reproduces the conv's zero padding in width implicitly.
    """
    c_out, c_in = w_oihw.shape[:2]
    wk = jnp.transpose(w_oihw, (2, 3, 1, 0))                 # (kh, kw, cin, cout)
    # band[kw, w_in, w_out] = 1  iff  w_in == w_out + kw - 1
    band = jnp.stack([jnp.eye(W, k=1), jnp.eye(W), jnp.eye(W, k=-1)], axis=0)
    bw = jnp.einsum("kab,hkio->haibo", band.astype(wk.dtype), wk)
    return bw.reshape(3 * W * c_in, W * c_out).astype(jnp.bfloat16)


def resnet_block_forward_nhwc(x_nhwc, w1_oihw, w2_oihw, bn_params):
    """ResNetBlock forward (subsample=False). x: (N, H, W, C) f32 -> (N, H, W, C)."""
    N, H, W, C = x_nhwc.shape
    c_out1, c_in1 = w1_oihw.shape[:2]
    if not (c_in1 == c_out1 == C and tuple(w2_oihw.shape[:2]) == (C, C)):
        raise ValueError(
            "resnet_block_forward implements the subsample=False path and "
            f"requires c_in == c_out == C; got C={C}, w1={w1_oihw.shape}, "
            f"w2={w2_oihw.shape}")
    WC = W * C

    w1 = _banded_conv_weight(w1_oihw, W)
    w2 = _banded_conv_weight(w2_oihw, W)

    # Fold inference BatchNorm into per-channel scale/shift, pre-tiled to the
    # lane-dense (W*C) layout so the in-kernel epilogue is a dense VPU pass.
    gamma, beta, mean, var = (bn_params[:, i, :] for i in range(4))
    scale = gamma * jax.lax.rsqrt(var + EPS)                       # (2, C)
    shift = beta - mean * scale                                    # (2, C)
    ss = jnp.tile(jnp.stack([scale[0], shift[0], scale[1], shift[1]], 0),
                  (1, W))                                          # (4, W*C)

    # (N, H, W, C) -> (N, H, W*C): free reshape, rows stay contiguous in HBM,
    # so the per-image input DMA and residual load are lane-dense.
    x_flat = x_nhwc.reshape(N, H, WC)

    # Right-size the VMEM ask from the actual footprint (double-buffered
    # blocks + headroom) instead of a blanket 32 MiB.
    blk_bytes = 2 * (H * WC * 4) + 2 * (3 * WC * WC * 2) + 4 * WC * 4
    vmem_limit = max(4 * 1024 * 1024, 2 * blk_bytes + (1 << 21))

    out = pl.pallas_call(
        resnet_block_kernel,
        out_shape=jax.ShapeDtypeStruct((N, H, WC), jnp.float32),
        grid=(N,),
        in_specs=[
            pl.BlockSpec((None, H, WC), lambda n: (n, 0, 0)),
            pl.BlockSpec((3 * WC, WC), lambda n: (0, 0)),
            pl.BlockSpec((3 * WC, WC), lambda n: (0, 0)),
            pl.BlockSpec((4, WC), lambda n: (0, 0)),
        ],
        out_specs=pl.BlockSpec((None, H, WC), lambda n: (n, 0, 0)),
        compiler_params=pltpu.CompilerParams(
            dimension_semantics=("parallel",),
            vmem_limit_bytes=int(vmem_limit),
        ),
    )(x_flat, w1, w2, ss)

    return out.reshape(N, H, W, C)


def resnet_block_forward(x_nchw, w1_oihw, w2_oihw, bn_params):
    """NCHW entry point matching the PyTorch module's layout.

    NHWC-native callers should use resnet_block_forward_nhwc directly and skip
    these two full-tensor transposes (they can cost more than the kernel).
    """
    x_nhwc = jnp.transpose(x_nchw, (0, 2, 3, 1))
    out = resnet_block_forward_nhwc(x_nhwc, w1_oihw, w2_oihw, bn_params)
    return jnp.transpose(out, (0, 3, 1, 2))


def resnet_block_reference(x, w1, w2, bn):
    """Pure-JAX reference (NCHW, f32), matching the PyTorch module in eval mode."""
    dn = jax.lax.conv_dimension_numbers(x.shape, w1.shape, ("NCHW", "OIHW", "NCHW"))

    def bn_apply(z, p):
        g, b, m, v = p[0], p[1], p[2], p[3]
        s = g * jax.lax.rsqrt(v + EPS)
        return z * s[None, :, None, None] + (b - m * s)[None, :, None, None]

    z = jax.lax.conv_general_dilated(x, w1, (1, 1), ((1, 1), (1, 1)),
                                     dimension_numbers=dn)
    z = jnp.maximum(bn_apply(z, bn[0]), 0.0)
    z = jax.lax.conv_general_dilated(z, w2, (1, 1), ((1, 1), (1, 1)),
                                     dimension_numbers=dn)
    z = bn_apply(z, bn[1])
    return jnp.maximum(z + x, 0.0)


if __name__ == "__main__":
    key = jax.random.PRNGKey(0)
    k_x, k_w1, k_w2, k_g, k_b, k_m, k_v = jax.random.split(key, 7)

    N, C, H, W = 2, 8, 16, 16  # subsample=False => c_in == c_out; W*C = 128 lanes

    x = jax.random.normal(k_x, (N, C, H, W), jnp.float32)
    w1 = 0.1 * jax.random.normal(k_w1, (C, C, 3, 3), jnp.float32)  # OIHW, bias=False
    w2 = 0.1 * jax.random.normal(k_w2, (C, C, 3, 3), jnp.float32)

    gamma = 1.0 + 0.1 * jax.random.normal(k_g, (2, C), jnp.float32)
    beta = 0.1 * jax.random.normal(k_b, (2, C), jnp.float32)
    mean = 0.1 * jax.random.normal(k_m, (2, C), jnp.float32)
    var = 0.5 + jnp.abs(jax.random.normal(k_v, (2, C), jnp.float32))
    bn_params = jnp.stack([gamma, beta, mean, var], axis=1)  # (2, 4, C)

    fwd = jax.jit(resnet_block_forward)
    out = jax.block_until_ready(fwd(x, w1, w2, bn_params))

    ref = resnet_block_reference(x, w1, w2, bn_params)
    # bf16 MXU operands (f32 accumulation) => looser tolerance than pure-f32.
    np.testing.assert_allclose(np.asarray(out), np.asarray(ref), rtol=5e-2, atol=5e-2)

    print("KERNEL_OK")
</pallas_src>

<mosaic_0001>
module attributes {stable_mosaic.version = 11 : i64} {
  func.func @resnet_block_kernel(%arg0: i32, %arg1: memref<1x16x128xf32, #tpu.memory_space<vmem>>, %arg2: memref<384x128xbf16, #tpu.memory_space<vmem>>, %arg3: memref<384x128xbf16, #tpu.memory_space<vmem>>, %arg4: memref<4x128xf32, #tpu.memory_space<vmem>>, %arg5: memref<1x16x128xf32, #tpu.memory_space<vmem>>) attributes {dimension_semantics = [#tpu.dimension_semantics<parallel>], iteration_bounds = array<i64: 2>, scalar_prefetch = 0 : i64, scratch_operands = 0 : i64, tpu.core_type = #tpu.core_type<tc>, window_params = [{transform_indices = @transform_0, window_bounds = array<i64: 1, 16, 128>}, {pipeline_mode = #tpu.pipeline_mode<synchronous>, transform_indices = @transform_1, window_bounds = array<i64: 384, 128>}, {pipeline_mode = #tpu.pipeline_mode<synchronous>, transform_indices = @transform_2, window_bounds = array<i64: 384, 128>}, {pipeline_mode = #tpu.pipeline_mode<synchronous>, transform_indices = @transform_3, window_bounds = array<i64: 4, 128>}, {transform_indices = @transform_4, window_bounds = array<i64: 1, 16, 128>}]} {
    %c0 = arith.constant 0 : index
    %c0_0 = arith.constant 0 : index
    %c0_1 = arith.constant 0 : index
    %0 = vector.load %arg1[%c0, %c0_0, %c0_1] : memref<1x16x128xf32, #tpu.memory_space<vmem>>, vector<1x16x128xf32>
    %1 = vector.shape_cast %0 : vector<1x16x128xf32> to vector<16x128xf32>
    %c0_2 = arith.constant 0 : index
    %c0_3 = arith.constant 0 : index
    %2 = vector.load %arg4[%c0_2, %c0_3] : memref<4x128xf32, #tpu.memory_space<vmem>>, vector<1x128xf32>
    %c1 = arith.constant 1 : index
    %c0_4 = arith.constant 0 : index
    %3 = vector.load %arg4[%c1, %c0_4] : memref<4x128xf32, #tpu.memory_space<vmem>>, vector<1x128xf32>
    %c2 = arith.constant 2 : index
    %c0_5 = arith.constant 0 : index
    %4 = vector.load %arg4[%c2, %c0_5] : memref<4x128xf32, #tpu.memory_space<vmem>>, vector<1x128xf32>
    %c3 = arith.constant 3 : index
    %c0_6 = arith.constant 0 : index
    %5 = vector.load %arg4[%c3, %c0_6] : memref<4x128xf32, #tpu.memory_space<vmem>>, vector<1x128xf32>
    %cst = arith.constant 0.000000e+00 : f32
    %6 = vector.broadcast %cst : f32 to vector<1x128xf32>
    %7 = vector.extract_strided_slice %1 {offsets = [0, 0], sizes = [15, 128], strides = [1, 1]} : vector<16x128xf32> to vector<15x128xf32>
    %8 = tpu.concatenate %6, %7 in 0 : vector<1x128xf32>, vector<15x128xf32> -> vector<16x128xf32>
    %9 = vector.extract_strided_slice %1 {offsets = [1, 0], sizes = [15, 128], strides = [1, 1]} : vector<16x128xf32> to vector<15x128xf32>
    %10 = tpu.concatenate %9, %6 in 0 : vector<15x128xf32>, vector<1x128xf32> -> vector<16x128xf32>
    %11 = tpu.concatenate %8, %1, %10 in 1 : vector<16x128xf32>, vector<16x128xf32>, vector<16x128xf32> -> vector<16x384xf32>
    %12 = arith.truncf %11 : vector<16x384xf32> to vector<16x384xbf16>
    %c0_7 = arith.constant 0 : index
    %c0_8 = arith.constant 0 : index
    %13 = vector.load %arg2[%c0_7, %c0_8] : memref<384x128xbf16, #tpu.memory_space<vmem>>, vector<384x128xbf16>
    %cst_9 = arith.constant dense<0.000000e+00> : vector<16x128xf32>
    %14 = tpu.matmul %12, %13, %cst_9 {dimension_numbers = #tpu.dot_dimension_numbers<[1], [0], [0], [1], [0, 0, 1, 1], [], []>} : vector<16x384xbf16>, vector<384x128xbf16>, vector<16x128xf32> -> vector<16x128xf32>
    %15 = vector.broadcast %2 : vector<1x128xf32> to vector<16x128xf32>
    %16 = arith.mulf %14, %15 : vector<16x128xf32>
    %17 = vector.broadcast %3 : vector<1x128xf32> to vector<16x128xf32>
    %18 = arith.addf %16, %17 : vector<16x128xf32>
    %cst_10 = arith.constant 0.000000e+00 : f32
    %19 = vector.broadcast %cst_10 : f32 to vector<16x128xf32>
    %20 = arith.maximumf %18, %19 : vector<16x128xf32>
    %cst_11 = arith.constant 0.000000e+00 : f32
    %21 = vector.broadcast %cst_11 : f32 to vector<1x128xf32>
    %22 = vector.extract_strided_slice %20 {offsets = [0, 0], sizes = [15, 128], strides = [1, 1]} : vector<16x128xf32> to vector<15x128xf32>
    %23 = tpu.concatenate %21, %22 in 0 : vector<1x128xf32>, vector<15x128xf32> -> vector<16x128xf32>
    %24 = vector.extract_strided_slice %20 {offsets = [1, 0], sizes = [15, 128], strides = [1, 1]} : vector<16x128xf32> to vector<15x128xf32>
    %25 = tpu.concatenate %24, %21 in 0 : vector<15x128xf32>, vector<1x128xf32> -> vector<16x128xf32>
    %26 = tpu.concatenate %23, %20, %25 in 1 : vector<16x128xf32>, vector<16x128xf32>, vector<16x128xf32> -> vector<16x384xf32>
    %27 = arith.truncf %26 : vector<16x384xf32> to vector<16x384xbf16>
    %c0_12 = arith.constant 0 : index
    %c0_13 = arith.constant 0 : index
    %28 = vector.load %arg3[%c0_12, %c0_13] : memref<384x128xbf16, #tpu.memory_space<vmem>>, vector<384x128xbf16>
    %cst_14 = arith.constant dense<0.000000e+00> : vector<16x128xf32>
    %29 = tpu.matmul %27, %28, %cst_14 {dimension_numbers = #tpu.dot_dimension_numbers<[1], [0], [0], [1], [0, 0, 1, 1], [], []>} : vector<16x384xbf16>, vector<384x128xbf16>, vector<16x128xf32> -> vector<16x128xf32>
    %30 = vector.broadcast %4 : vector<1x128xf32> to vector<16x128xf32>
    %31 = arith.mulf %29, %30 : vector<16x128xf32>
    %32 = vector.broadcast %5 : vector<1x128xf32> to vector<16x128xf32>
    %33 = arith.addf %31, %32 : vector<16x128xf32>
    %34 = arith.addf %33, %1 : vector<16x128xf32>
    %cst_15 = arith.constant 0.000000e+00 : f32
    %35 = vector.broadcast %cst_15 : f32 to vector<16x128xf32>
    %36 = arith.maximumf %34, %35 : vector<16x128xf32>
    %c0_16 = arith.constant 0 : index
    %c0_17 = arith.constant 0 : index
    %c0_18 = arith.constant 0 : index
    %37 = vector.load %arg5[%c0_16, %c0_17, %c0_18] : memref<1x16x128xf32, #tpu.memory_space<vmem>>, vector<1x16x128xf32>
    %38 = vector.shape_cast %37 : vector<1x16x128xf32> to vector<16x128xf32>
    %39 = vector.shape_cast %36 : vector<16x128xf32> to vector<1x16x128xf32>
    tpu.vector_store %arg5[%c0_16, %c0_17, %c0_18], %39 {strides = array<i32>} : memref<1x16x128xf32, #tpu.memory_space<vmem>>, vector<1x16x128xf32>,
    return
  }
  func.func @transform_0(%arg0: i32) -> (i32, i32, i32) {
    %c0_i32 = arith.constant 0 : i32
    %c0_i32_0 = arith.constant 0 : i32
    %c0_i32_1 = arith.constant 0 : i32
    return %arg0, %c0_i32, %c0_i32_0 : i32, i32, i32
  }
  func.func @transform_1(%arg0: i32) -> (i32, i32) {
    %c0_i32 = arith.constant 0 : i32
    %c0_i32_0 = arith.constant 0 : i32
    %c0_i32_1 = arith.constant 0 : i32
    return %c0_i32, %c0_i32_0 : i32, i32
  }
  func.func @transform_2(%arg0: i32) -> (i32, i32) {
    %c0_i32 = arith.constant 0 : i32
    %c0_i32_0 = arith.constant 0 : i32
    %c0_i32_1 = arith.constant 0 : i32
    return %c0_i32, %c0_i32_0 : i32, i32
  }
  func.func @transform_3(%arg0: i32) -> (i32, i32) {
    %c0_i32 = arith.constant 0 : i32
    %c0_i32_0 = arith.constant 0 : i32
    %c0_i32_1 = arith.constant 0 : i32
    return %c0_i32, %c0_i32_0 : i32, i32
  }
  func.func @transform_4(%arg0: i32) -> (i32, i32, i32) {
    %c0_i32 = arith.constant 0 : i32
    %c0_i32_0 = arith.constant 0 : i32
    %c0_i32_1 = arith.constant 0 : i32
    return %arg0, %c0_i32, %c0_i32_0 : i32, i32, i32
  }
}

</mosaic_0001>

<llo_original>
// kernel: tile.9
$region0: #{tile.9}
  %s0 = inlined_call_operand.vmem [shape: f32[4,16,8], index: 0, kind: input, shape index: {}]
  %s1 = inlined_call_operand.vmem [shape: f32[4,128], index: 1, kind: output, shape index: {}]
  $region1: #{tile.9} parent=0
    #allocation0 [shape = 'u8[4096]{0}', space=vmem, size = 0x1000, scoped, tag = 'scoped mem for output reshape']
    %s2 = smov 3
    %v3 = vld [vmem:[%s0] ss:$16 sm:%s2]
    %s4 = smov 12
    %v5 = vld [vmem:[%s0] ss:$16 sm:%s4]
    %vm6 = vcmask 1043458
    %v7 = vsel %vm6, %v5, %v3
    %vm8 = vcmask 64512
    %9 = vst.msk [vmem:[#allocation0] sm:$0xf] %vm8, %v7
    %s10 = scalar_lea.vmem %s0, 15
    %s11 = smov 3
    %v12 = vld [vmem:[%s10] ss:$16 sm:%s11]
    %s13 = scalar_lea.vmem %s0, 15
    %s14 = smov 12
    %v15 = vld [vmem:[%s13] ss:$16 sm:%s14]
    %vm16 = vcmask 1043458
    %v17 = vsel %vm16, %v15, %v12
    %18 = vrot.lane.b32.xlu0 %v17, 120
    %v19 = vpop.permute.xlu0 %18
    %vm20 = vcmask 1048512
    %21 = vst.msk [vmem:[#allocation0] sm:$0xf] %vm20, %v19
    %s22 = scalar_lea.vmem %s0, 14
    %s23 = smov 3
    %v24 = vld [vmem:[%s22] ss:$16 sm:%s23]
    %s25 = scalar_lea.vmem %s0, 14
    %s26 = smov 12
    %v27 = vld [vmem:[%s25] ss:$16 sm:%s26]
    %vm28 = vcmask 1043458
    %v29 = vsel %vm28, %v27, %v24
    %30 = vrot.lane.b32.xlu0 %v29, 112
    %v31 = vpop.permute.xlu0 %30
    %vm32 = vcmask 982912
    %33 = vst.msk [vmem:[#allocation0] sm:$0xf] %vm32, %v31
    %s34 = scalar_lea.vmem %s0, 13
    %s35 = smov 3
    %v36 = vld [vmem:[%s34] ss:$16 sm:%s35]
    %s37 = scalar_lea.vmem %s0, 13
    %s38 = smov 12
    %v39 = vld [vmem:[%s37] ss:$16 sm:%s38]
    %vm40 = vcmask 1043458
    %v41 = vsel %vm40, %v39, %v36
    %42 = vrot.lane.b32.xlu0 %v41, 104
    %v43 = vpop.permute.xlu0 %42
    %vm44 = vcmask 917312
    %45 = vst.msk [vmem:[#allocation0] sm:$0xf] %vm44, %v43
    %s46 = scalar_lea.vmem %s0, 12
    %s47 = smov 3
    %v48 = vld [vmem:[%s46] ss:$16 sm:%s47]
    %s49 = scalar_lea.vmem %s0, 12
    %s50 = smov 12
    %v51 = vld [vmem:[%s49] ss:$16 sm:%s50]
    %vm52 = vcmask 1043458
    %v53 = vsel %vm52, %v51, %v48
    %54 = vrot.lane.b32.xlu0 %v53, 96
    %v55 = vpop.permute.xlu0 %54
    %vm56 = vcmask 851712
    %57 = vst.msk [vmem:[#allocation0] sm:$0xf] %vm56, %v55
    %s58 = scalar_lea.vmem %s0, 11
    %s59 = smov 3
    %v60 = vld [vmem:[%s58] ss:$16 sm:%s59]
    %s61 = scalar_lea.vmem %s0, 11
    %s62 = smov 12
    %v63 = vld [vmem:[%s61] ss:$16 sm:%s62]
    %vm64 = vcmask 1043458
    %v65 = vsel %vm64, %v63, %v60
    %66 = vrot.lane.b32.xlu0 %v65, 88
    %v67 = vpop.permute.xlu0 %66
    %vm68 = vcmask 786112
    %69 = vst.msk [vmem:[#allocation0] sm:$0xf] %vm68, %v67
    %s70 = scalar_lea.vmem %s0, 10
    %s71 = smov 3
    %v72 = vld [vmem:[%s70] ss:$16 sm:%s71]
    %s73 = scalar_lea.vmem %s0, 10
    %s74 = smov 12
    %v75 = vld [vmem:[%s73] ss:$16 sm:%s74]
    %vm76 = vcmask 1043458
    %v77 = vsel %vm76, %v75, %v72
    %78 = vrot.lane.b32.xlu0 %v77, 80
    %v79 = vpop.permute.xlu0 %78
    %vm80 = vcmask 720512
    %81 = vst.msk [vmem:[#allocation0] sm:$0xf] %vm80, %v79
    %s82 = scalar_lea.vmem %s0, 9
    %s83 = smov 3
    %v84 = vld [vmem:[%s82] ss:$16 sm:%s83]
    %s85 = scalar_lea.vmem %s0, 9
    %s86 = smov 12
    %v87 = vld [vmem:[%s85] ss:$16 sm:%s86]
    %vm88 = vcmask 1043458
    %v89 = vsel %vm88, %v87, %v84
    %90 = vrot.lane.b32.xlu0 %v89, 72
    %v91 = vpop.permute.xlu0 %90
    %vm92 = vcmask 654912
    %93 = vst.msk [vmem:[#allocation0] sm:$0xf] %vm92, %v91
    %s94 = scalar_lea.vmem %s0, 8
    %s95 = smov 3
    %v96 = vld [vmem:[%s94] ss:$16 sm:%s95]
    %s97 = scalar_lea.vmem %s0, 8
    %s98 = smov 12
    %v99 = vld [vmem:[%s97] ss:$16 sm:%s98]
    %vm100 = vcmask 1043458
    %v101 = vsel %vm100, %v99, %v96
    %102 = vrot.lane.b32.xlu0 %v101, 64
    %v103 = vpop.permute.xlu0 %102
    %vm104 = vcmask 589312
    %105 = vst.msk [vmem:[#allocation0] sm:$0xf] %vm104, %v103
    %s106 = scalar_lea.vmem %s0, 7
    %s107 = smov 3
    %v108 = vld [vmem:[%s106] ss:$16 sm:%s107]
    %s109 = scalar_lea.vmem %s0, 7
    %s110 = smov 12
    %v111 = vld [vmem:[%s109] ss:$16 sm:%s110]
    %vm112 = vcmask 1043458
    %v113 = vsel %vm112, %v111, %v108
    %114 = vrot.lane.b32.xlu0 %v113, 56
    %v115 = vpop.permute.xlu0 %114
    %vm116 = vcmask 523712
    %117 = vst.msk [vmem:[#allocation0] sm:$0xf] %vm116, %v115
    %s118 = scalar_lea.vmem %s0, 6
    %s119 = smov 3
    %v120 = vld [vmem:[%s118] ss:$16 sm:%s119]
    %s121 = scalar_lea.vmem %s0, 6
    %s122 = smov 12
    %v123 = vld [vmem:[%s121] ss:$16 sm:%s122]
    %vm124 = vcmask 1043458
    %v125 = vsel %vm124, %v123, %v120
    %126 = vrot.lane.b32.xlu0 %v125, 48
    %v127 = vpop.permute.xlu0 %126
    %vm128 = vcmask 458112
    %129 = vst.msk [vmem:[#allocation0] sm:$0xf] %vm128, %v127
    %s130 = scalar_lea.vmem %s0, 5
    %s131 = smov 3
    %v132 = vld [vmem:[%s130] ss:$16 sm:%s131]
    %s133 = scalar_lea.vmem %s0, 5
    %s134 = smov 12
    %v135 = vld [vmem:[%s133] ss:$16 sm:%s134]
    %vm136 = vcmask 1043458
    %v137 = vsel %vm136, %v135, %v132
    %138 = vrot.lane.b32.xlu0 %v137, 40
    %v139 = vpop.permute.xlu0 %138
    %vm140 = vcmask 392512
    %141 = vst.msk [vmem:[#allocation0] sm:$0xf] %vm140, %v139
    %s142 = scalar_lea.vmem %s0, 4
    %s143 = smov 3
    %v144 = vld [vmem:[%s142] ss:$16 sm:%s143]
    %s145 = scalar_lea.vmem %s0, 4
    %s146 = smov 12
    %v147 = vld [vmem:[%s145] ss:$16 sm:%s146]
    %vm148 = vcmask 1043458
    %v149 = vsel %vm148, %v147, %v144
    %150 = vrot.lane.b32.xlu0 %v149, 32
    %v151 = vpop.permute.xlu0 %150
    %vm152 = vcmask 326912
    %153 = vst.msk [vmem:[#allocation0] sm:$0xf] %vm152, %v151
    %s154 = scalar_lea.vmem %s0, 3
    %s155 = smov 3
    %v156 = vld [vmem:[%s154] ss:$16 sm:%s155]
    %s157 = scalar_lea.vmem %s0, 3
    %s158 = smov 12
    %v159 = vld [vmem:[%s157] ss:$16 sm:%s158]
    %vm160 = vcmask 1043458
    %v161 = vsel %vm160, %v159, %v156
    %162 = vrot.lane.b32.xlu0 %v161, 24
    %v163 = vpop.permute.xlu0 %162
    %vm164 = vcmask 261312
    %165 = vst.msk [vmem:[#allocation0] sm:$0xf] %vm164, %v163
    %s166 = scalar_lea.vmem %s0, 2
    %s167 = smov 3
    %v168 = vld [vmem:[%s166] ss:$16 sm:%s167]
    %s169 = scalar_lea.vmem %s0, 2
    %s170 = smov 12
    %v171 = vld [vmem:[%s169] ss:$16 sm:%s170]
    %vm172 = vcmask 1043458
    %v173 = vsel %vm172, %v171, %v168
    %174 = vrot.lane.b32.xlu0 %v173, 16
    %v175 = vpop.permute.xlu0 %174
    %vm176 = vcmask 195712
    %177 = vst.msk [vmem:[#allocation0] sm:$0xf] %vm176, %v175
    %s178 = scalar_lea.vmem %s0, 1
    %s179 = smov 3
    %v180 = vld [vmem:[%s178] ss:$16 sm:%s179]
    %s181 = scalar_lea.vmem %s0, 1
    %s182 = smov 12
    %v183 = vld [vmem:[%s181] ss:$16 sm:%s182]
    %vm184 = vcmask 1043458
    %v185 = vsel %vm184, %v183, %v180
    %186 = vrot.lane.b32.xlu0 %v185, 8
    %v187 = vpop.permute.xlu0 %186
    %vm188 = vcmask 130112
    %189 = vst.msk [vmem:[#allocation0] sm:$0xf] %vm188, %v187
    %s191 = sshllo.u32 0, 4
    %v193 = vld [vmem:[#allocation0] sm:%s191]
    %s194 = sshllo.u32 0, 4
    %195 = vst [vmem:[%s1] sm:%s194] %v193

// kernel: resnet_block_forward.1
$region0: #{resnet_block_forward.1}
  #allocation0 [shape = 'u32[]', space=smem, size = 0x4, offset = 0x4, fixed_abs, tag = 'smem constant byte address 0x4 - core index']
  #allocation1 [shape = 'u32[144,128]{1,0:T(1,128)}', space=vmem, size = 0x12000, scoped, tag = 'internal scratch']
  %s0 = inlined_call_operand.vmem [shape: f32[2,16,128], index: 0, kind: input, shape index: {}]
  %s1 = inlined_call_operand.vmem [shape: bf16[384,128], index: 1, kind: input, shape index: {}]
  %s2 = inlined_call_operand.vmem [shape: bf16[384,128], index: 2, kind: input, shape index: {}]
  %s3 = inlined_call_operand.vmem [shape: f32[4,128], index: 3, kind: input, shape index: {}]
  %s4 = inlined_call_operand.vmem [shape: f32[2,16,128], index: 4, kind: output, shape index: {}]
  %s5 = sld [smem:[#allocation0]]
  $region49: #{resnet_block_forward.1} parent=0
    _
  %s7 = ssub.s32 1, %s5
  %s8 = scalar_select 0, %s7, %s5
  loop: start=0, step=1, limit=4
  $region2: #{resnet_block_forward.1} parent=0 // loop_pre_header
    _
  $region3: #{resnet_block_forward.1} parent=0 // loop_header
    %s10 = sphi 0, %s14
    %p11 = scmp.ge.s32.totalorder %s10, 4
    %s20 = sphi 0, %s22
    %s23 = sphi 0, %s20
    %s24 = sphi 0, %s23
    %s40 = sphi 0, %s24
    %s44 = sphi 0, %s44
    %s46 = sphi 0, %s44
    %s47 = sphi 0, %s46
    %s61 = sphi 0, %s47
    %s65 = sphi 0, %s65
    %s67 = sphi 0, %s65
    %s68 = sphi 0, %s67
    %s82 = sphi 0, %s68
    %s86 = sphi 0, %s86
    %s88 = sphi 0, %s86
    %s89 = sphi 0, %s88
    %s103 = sphi 0, %s89
    %s109 = sphi 0, %s111
    %s112 = sphi 0, %s109
    %s113 = sphi 0, %s112
    %s129 = sphi 0, %s113
  $region4: #{resnet_block_forward.1} parent=0 // loop_header_branch
    %13 = sbr.rel (%p11) target = $region8
  $region5: #{resnet_block_forward.1} parent=0 // loop_body
    %s15 = ssub.s32 %s10, 1
    %s16 = ssub.s32 %s10, 2
    %s17 = sadd.s32 %s10, 1
    %s18 = ssub.s32 %s10, %s17
    %p19 = scmp.eq.s32.totalorder %s18, 0
    %s21 = sadd.s32 %s20, 1
    %s22 = scalar_select %p19, %s20, %s21
    %p25 = pneg %p19
    %p26 = scmp.eq.s32.totalorder %s10, 1
    %p27 = por %p25, %p26
    %p28 = scmp.ne.s32.totalorder %s20, %s23
    %p29 = scmp.eq.s32.totalorder %s10, 0
    %p30 = por %p28, %p29
    %p31 = scmp.ne.s32.totalorder %s20, %s23
    %p32 = scmp.eq.s32.totalorder %s15, 1
    %p33 = por %p31, %p32
    %p34 = scmp.ne.s32.totalorder %s23, %s24
    %p35 = scmp.eq.s32.totalorder %s15, 0
    %p36 = por %p34, %p35
    %p37 = scmp.ne.s32.totalorder %s23, %s24
    %p38 = scmp.eq.s32.totalorder %s16, 1
    %p39 = por %p37, %p38
    %p41 = scmp.ne.s32.totalorder %s24, %s40
    %p42 = scmp.eq.s32.totalorder %s16, 0
    %p43 = por %p41, %p42
    %s45 = sadd.s32 %s44, 1
    %p48 = scmp.eq.s32.totalorder %s10, 1
    %p49 = scmp.ne.s32.totalorder %s44, %s46
    %p50 = scmp.eq.s32.totalorder %s10, 0
    %p51 = por %p49, %p50
    %p52 = scmp.ne.s32.totalorder %s44, %s46
    %p53 = scmp.eq.s32.totalorder %s15, 1
    %p54 = por %p52, %p53
    %p55 = scmp.ne.s32.totalorder %s46, %s47
    %p56 = scmp.eq.s32.totalorder %s15, 0
    %p57 = por %p55, %p56
    %p58 = scmp.ne.s32.totalorder %s46, %s47
    %p59 = scmp.eq.s32.totalorder %s16, 1
    %p60 = por %p58, %p59
    %p62 = scmp.ne.s32.totalorder %s47, %s61
    %p63 = scmp.eq.s32.totalorder %s16, 0
    %p64 = por %p62, %p63
    %s66 = sadd.s32 %s65, 1
    %p69 = scmp.eq.s32.totalorder %s10, 1
    %p70 = scmp.ne.s32.totalorder %s65, %s67
    %p71 = scmp.eq.s32.totalorder %s10, 0
    %p72 = por %p70, %p71
    %p73 = scmp.ne.s32.totalorder %s65, %s67
    %p74 = scmp.eq.s32.totalorder %s15, 1
    %p75 = por %p73, %p74
    %p76 = scmp.ne.s32.totalorder %s67, %s68
    %p77 = scmp.eq.s32.totalorder %s15, 0
    %p78 = por %p76, %p77
    %p79 = scmp.ne.s32.totalorder %s67, %s68
    %p80 = scmp.eq.s32.totalorder %s16, 1
    %p81 = por %p79, %p80
    %p83 = scmp.ne.s32.totalorder %s68, %s82
    %p84 = scmp.eq.s32.totalorder %s16, 0
    %p85 = por %p83, %p84
    %s87 = sadd.s32 %s86, 1
    %p90 = scmp.eq.s32.totalorder %s10, 1
    %p91 = scmp.ne.s32.totalorder %s86, %s88
    %p92 = scmp.eq.s32.totalorder %s10, 0
    %p93 = por %p91, %p92
    %p94 = scmp.ne.s32.totalorder %s86, %s88
    %p95 = scmp.eq.s32.totalorder %s15, 1
    %p96 = por %p94, %p95
    %p97 = scmp.ne.s32.totalorder %s88, %s89
    %p98 = scmp.eq.s32.totalorder %s15, 0
    %p99 = por %p97, %p98
    %p100 = scmp.ne.s32.totalorder %s88, %s89
    %p101 = scmp.eq.s32.totalorder %s16, 1
    %p102 = por %p100, %p101
    %p104 = scmp.ne.s32.totalorder %s89, %s103
    %p105 = scmp.eq.s32.totalorder %s16, 0
    %p106 = por %p104, %p105
    %s107 = ssub.s32 %s10, %s17
    %p108 = scmp.eq.s32.totalorder %s107, 0
    %s110 = sadd.s32 %s109, 1
    %s111 = scalar_select %p108, %s109, %s110
    %p114 = pneg %p108
    %p115 = scmp.eq.s32.totalorder %s10, 1
    %p116 = por %p114, %p115
    %p117 = scmp.ne.s32.totalorder %s109, %s112
    %p118 = scmp.eq.s32.totalorder %s10, 0
    %p119 = por %p117, %p118
    %p120 = scmp.ne.s32.totalorder %s109, %s112
    %p121 = scmp.eq.s32.totalorder %s15, 1
    %p122 = por %p120, %p121
    %p123 = scmp.ne.s32.totalorder %s112, %s113
    %p124 = scmp.eq.s32.totalorder %s15, 0
    %p125 = por %p123, %p124
    %p126 = scmp.ne.s32.totalorder %s112, %s113
    %p127 = scmp.eq.s32.totalorder %s16, 1
    %p128 = por %p126, %p127
    %p130 = scmp.ne.s32.totalorder %s113, %s129
    %p131 = scmp.eq.s32.totalorder %s16, 0
    %p132 = por %p130, %p131
    %p133 = scmp.le.s32.totalorder 1, %s10
    %p134 = scmp.lt.s32.totalorder %s10, 3
    %p135 = pnand %p133, %p134
    %p136 = pneg %p135
    // Predicated region
    $region9: #{resnet_block_forward.1} parent=5 // pred_check
      _
    $region10: #{resnet_block_forward.1} parent=5 // pred_check_branch
      %138 = sbr.rel (%p135) target = $region12
    $region11: #{resnet_block_forward.1} parent=5 // pred_region
      %s139 = ssub.s32 %s10, 1
      // Predicated region
      $region13: #{resnet_block_forward.1} parent=11 // pred_check
        %p140 = pneg %p57
      $region14: #{resnet_block_forward.1} parent=11 // pred_check_branch
        %142 = sbr.rel (%p140) target = $region16
      $region15: #{resnet_block_forward.1} parent=11 // pred_region
        _
      $region16: #{resnet_block_forward.1} parent=11 // pred_fallthru
        _
      // Predicated region
      $region17: #{resnet_block_forward.1} parent=11 // pred_check
        %p143 = pneg %p78
      $region18: #{resnet_block_forward.1} parent=11 // pred_check_branch
        %145 = sbr.rel (%p143) target = $region20
      $region19: #{resnet_block_forward.1} parent=11 // pred_region
        _
      $region20: #{resnet_block_forward.1} parent=11 // pred_fallthru
        _
      // Predicated region
      $region21: #{resnet_block_forward.1} parent=11 // pred_check
        %p146 = pneg %p99
      $region22: #{resnet_block_forward.1} parent=11 // pred_check_branch
        %148 = sbr.rel (%p146) target = $region24
      $region23: #{resnet_block_forward.1} parent=11 // pred_region
        _
      $region24: #{resnet_block_forward.1} parent=11 // pred_fallthru
        _
    $region12: #{resnet_block_forward.1} parent=5 // pred_fallthru
      _
    %p149 = scmp.lt.s32.totalorder %s10, 2
    // Predicated region
    $region25: #{resnet_block_forward.1} parent=5 // pred_check
      %p150 = pneg %p149
    $region26: #{resnet_block_forward.1} parent=5 // pred_check_branch
      %152 = sbr.rel (%p150) target = $region28
    $region27: #{resnet_block_forward.1} parent=5 // pred_region
      // Predicated region
      $region29: #{resnet_block_forward.1} parent=27 // pred_check
        %p153 = pneg %p30
      $region30: #{resnet_block_forward.1} parent=27 // pred_check_branch
        %155 = sbr.rel (%p153) target = $region32
      $region31: #{resnet_block_forward.1} parent=27 // pred_region
        %p156 = scmp.lt.s32.totalorder %s10, 1
        %s157 = scalar_select %p156, %s10, 1
        %s158 = smul.addr %s157, 2
        %s159 = smul.addr %s158, 8
        %s160 = scalar_lea.vmem %s0, %s159
      $region32: #{resnet_block_forward.1} parent=27 // pred_fallthru
        _
    $region28: #{resnet_block_forward.1} parent=5 // pred_fallthru
      _
    %p161 = scmp.le.s32.totalorder 1, %s10
    %p162 = scmp.lt.s32.totalorder %s10, 3
    %p163 = pnand %p161, %p162
    %p164 = pneg %p163
    // Predicated region
    $region33: #{resnet_block_forward.1} parent=5 // pred_check
      _
    $region34: #{resnet_block_forward.1} parent=5 // pred_check_branch
      %166 = sbr.rel (%p163) target = $region36
    $region35: #{resnet_block_forward.1} parent=5 // pred_region
      %s167 = ssub.s32 %s10, 1
      %p168 = scmp.lt.s32.totalorder %s15, 1
      %s169 = scalar_select %p168, %s15, 1
      %s170 = smul.addr %s169, 2
      %s171 = smul.addr %s170, 8
      %s172 = scalar_lea.vmem %s0, %s171
      %p173 = pneg %p36
      %p174 = pneg %p33
      %p175 = pneg %p57
      %p176 = pneg %p54
      %p177 = pneg %p78
      %p178 = pneg %p75
      %p179 = pneg %p99
      %p180 = pneg %p96
      %p181 = pneg %p125
      %p182 = pneg %p122
      %p183 = scmp.lt.s32.totalorder %s15, 1
      %s184 = scalar_select %p183, %s15, 1
      %s185 = smul.addr %s184, 2
      %s186 = smul.addr %s185, 8
      %s187 = scalar_lea.vmem %s4, %s186
      %p188 = scmp.lt.s32.totalorder %s15, 1
      %s189 = scalar_select %p188, %s15, 1
      %s190 = smul.addr %s189, 2
      %s191 = smul.addr %s190, 8
      %s192 = scalar_lea.vmem %s0, %s191
      %p193 = scmp.lt.s32.totalorder %s15, 1
      %s194 = scalar_select %p193, %s15, 1
      %s195 = smul.addr %s194, 2
      %s196 = smul.addr %s195, 8
      %s197 = scalar_lea.vmem %s4, %s196
      %v199 = vld [vmem:[%s192] sm:$0xff]
      %v200 = vld [vmem:[%s192 + $0x8] sm:$0xff]
      %v201 = vld [vmem:[%s3] sm:$0x1]
      %v202 = vld [vmem:[%s3 + $0x1] sm:$0x1]
      %v203 = vld [vmem:[%s3 + $0x2] sm:$0x1]
      %v204 = vld [vmem:[%s3 + $0x3] sm:$0x1]
      %vm207 = vcmask 1040384
      %v208 = vrot.slane %v199, 7
      %v209 = vrot.slane %v200, 7
      %v210 = vsel %vm207, %v208, %v209
      %v213 = vsel %vm207, 0.0, %v208
      %vm214 = vcmask 1046528
      %v215 = vrot.slane %v199, 1
      %v216 = vrot.slane %v200, 1
      %v217 = vsel %vm214, %v215, %v216
      %v220 = vsel %vm214, %v216, 0.0
      %v221 = vpack.c.bf16 %v210, %v213
      %v222 = vpack.c.bf16 %v200, %v199
      %v223 = vpack.c.bf16 %v220, %v217
      %v224 = vld [vmem:[%s1] sm:$0xf]
      %v225 = vld [vmem:[%s1 + $0x4] sm:$0xf]
      %v226 = vld [vmem:[%s1 + $0x8] sm:$0xf]
      %v227 = vld [vmem:[%s1 + $0xc] sm:$0xf]
      %v228 = vld [vmem:[%s1 + $0x10] sm:$0xf]
      %v229 = vld [vmem:[%s1 + $0x14] sm:$0xf]
      %v230 = vld [vmem:[%s1 + $0x18] sm:$0xf]
      %v231 = vld [vmem:[%s1 + $0x1c] sm:$0xf]
      %v232 = vld [vmem:[%s1 + $0x20] sm:$0xf]
      %v233 = vld [vmem:[%s1 + $0x24] sm:$0xf]
      %v234 = vld [vmem:[%s1 + $0x28] sm:$0xf]
      %v235 = vld [vmem:[%s1 + $0x2c] sm:$0xf]
      %v236 = vld [vmem:[%s1 + $0x30] sm:$0xf]
      %v237 = vld [vmem:[%s1 + $0x34] sm:$0xf]
      %v238 = vld [vmem:[%s1 + $0x38] sm:$0xf]
      %v239 = vld [vmem:[%s1 + $0x3c] sm:$0xf]
      %v240 = vld [vmem:[%s1 + $0x40] sm:$0xf]
      %v241 = vld [vmem:[%s1 + $0x44] sm:$0xf]
      %v242 = vld [vmem:[%s1 + $0x48] sm:$0xf]
      %v243 = vld [vmem:[%s1 + $0x4c] sm:$0xf]
      %v244 = vld [vmem:[%s1 + $0x50] sm:$0xf]
      %v245 = vld [vmem:[%s1 + $0x54] sm:$0xf]
      %v246 = vld [vmem:[%s1 + $0x58] sm:$0xf]
      %v247 = vld [vmem:[%s1 + $0x5c] sm:$0xf]
      %v248 = vld [vmem:[%s1 + $0x60] sm:$0xf]
      %v249 = vld [vmem:[%s1 + $0x64] sm:$0xf]
      %v250 = vld [vmem:[%s1 + $0x68] sm:$0xf]
      %v251 = vld [vmem:[%s1 + $0x6c] sm:$0xf]
      %v252 = vld [vmem:[%s1 + $0x70] sm:$0xf]
      %v253 = vld [vmem:[%s1 + $0x74] sm:$0xf]
      %v254 = vld [vmem:[%s1 + $0x78] sm:$0xf]
      %v255 = vld [vmem:[%s1 + $0x7c] sm:$0xf]
      %v256 = vld [vmem:[%s1 + $0x80] sm:$0xf]
      %v257 = vld [vmem:[%s1 + $0x84] sm:$0xf]
      %v258 = vld [vmem:[%s1 + $0x88] sm:$0xf]
      %v259 = vld [vmem:[%s1 + $0x8c] sm:$0xf]
      %v260 = vld [vmem:[%s1 + $0x90] sm:$0xf]
      %v261 = vld [vmem:[%s1 + $0x94] sm:$0xf]
      %v262 = vld [vmem:[%s1 + $0x98] sm:$0xf]
      %v263 = vld [vmem:[%s1 + $0x9c] sm:$0xf]
      %v264 = vld [vmem:[%s1 + $0xa0] sm:$0xf]
      %v265 = vld [vmem:[%s1 + $0xa4] sm:$0xf]
      %v266 = vld [vmem:[%s1 + $0xa8] sm:$0xf]
      %v267 = vld [vmem:[%s1 + $0xac] sm:$0xf]
      %v268 = vld [vmem:[%s1 + $0xb0] sm:$0xf]
      %v269 = vld [vmem:[%s1 + $0xb4] sm:$0xf]
      %v270 = vld [vmem:[%s1 + $0xb8] sm:$0xf]
      %v271 = vld [vmem:[%s1 + $0xbc] sm:$0xf]
      %v320 = vunpack.c.l.b16 %v224
      %v321 = vunpack.c.l.b16 %v225
      %v322 = vunpack.c.l.b16 %v226
      %v323 = vunpack.c.l.b16 %v227
      %v324 = vunpack.c.l.b16 %v228
      %v325 = vunpack.c.l.b16 %v229
      %v326 = vunpack.c.l.b16 %v230
      %v327 = vunpack.c.l.b16 %v231
      %v328 = vunpack.c.l.b16 %v232
      %v329 = vunpack.c.l.b16 %v233
      %v330 = vunpack.c.l.b16 %v234
      %v331 = vunpack.c.l.b16 %v235
      %v332 = vunpack.c.l.b16 %v236
      %v333 = vunpack.c.l.b16 %v237
      %v334 = vunpack.c.l.b16 %v238
      %v335 = vunpack.c.l.b16 %v239
      %v336 = vunpack.c.l.b16 %v240
      %v337 = vunpack.c.l.b16 %v241
      %v338 = vunpack.c.l.b16 %v242
      %v339 = vunpack.c.l.b16 %v243
      %v340 = vunpack.c.l.b16 %v244
      %v341 = vunpack.c.l.b16 %v245
      %v342 = vunpack.c.l.b16 %v246
      %v343 = vunpack.c.l.b16 %v247
      %v344 = vunpack.c.l.b16 %v248
      %v345 = vunpack.c.l.b16 %v249
      %v346 = vunpack.c.l.b16 %v250
      %v347 = vunpack.c.l.b16 %v251
      %v348 = vunpack.c.l.b16 %v252
      %v349 = vunpack.c.l.b16 %v253
      %v350 = vunpack.c.l.b16 %v254
      %v351 = vunpack.c.l.b16 %v255
      %v352 = vunpack.c.l.b16 %v256
      %v353 = vunpack.c.l.b16 %v257
      %v354 = vunpack.c.l.b16 %v258
      %v355 = vunpack.c.l.b16 %v259
      %v356 = vunpack.c.l.b16 %v260
      %v357 = vunpack.c.l.b16 %v261
      %v358 = vunpack.c.l.b16 %v262
      %v359 = vunpack.c.l.b16 %v263
      %v360 = vunpack.c.l.b16 %v264
      %v361 = vunpack.c.l.b16 %v265
      %v362 = vunpack.c.l.b16 %v266
      %v363 = vunpack.c.l.b16 %v267
      %v364 = vunpack.c.l.b16 %v268
      %v365 = vunpack.c.l.b16 %v269
      %v366 = vunpack.c.l.b16 %v270
      %v367 = vunpack.c.l.b16 %v271
      %v368 = vpack.c.b16 %v321, %v320
      %v369 = vpack.c.b16 %v323, %v322
      %v370 = vpack.c.b16 %v325, %v324
      %v371 = vpack.c.b16 %v327, %v326
      %v372 = vpack.c.b16 %v329, %v328
      %v373 = vpack.c.b16 %v331, %v330
      %v374 = vpack.c.b16 %v333, %v332
      %v375 = vpack.c.b16 %v335, %v334
      %v376 = vpack.c.b16 %v337, %v336
      %v377 = vpack.c.b16 %v339, %v338
      %v378 = vpack.c.b16 %v341, %v340
      %v379 = vpack.c.b16 %v343, %v342
      %v380 = vpack.c.b16 %v345, %v344
      %v381 = vpack.c.b16 %v347, %v346
      %v382 = vpack.c.b16 %v349, %v348
      %v383 = vpack.c.b16 %v351, %v350
      %v384 = vpack.c.b16 %v353, %v352
      %v385 = vpack.c.b16 %v355, %v354
      %v386 = vpack.c.b16 %v357, %v356
      %v387 = vpack.c.b16 %v359, %v358
      %v388 = vpack.c.b16 %v361, %v360
      %v389 = vpack.c.b16 %v363, %v362
      %v390 = vpack.c.b16 %v365, %v364
      %v391 = vpack.c.b16 %v367, %v366
      %416 = vmatprep.subr.bf16.mxu0 0
      %417 = vmatpush1.bf16.msra.mxu0 %v368
      %418 = vmatprep.subr.bf16.mxu0 0
      %419 = vmatpush1.bf16.msra.mxu0 %v369
      %420 = vmatprep.subr.bf16.mxu0 0
      %421 = vmatpush1.bf16.msra.mxu0 %v370
      %422 = vmatprep.subr.bf16.mxu0 0
      %423 = vmatpush1.bf16.msra.mxu0 %v371
      %424 = vmatprep.subr.bf16.mxu0 0
      %425 = vmatpush1.bf16.msra.mxu0 %v372
      %426 = vmatprep.subr.bf16.mxu0 0
      %427 = vmatpush1.bf16.msra.mxu0 %v373
      %428 = vmatprep.subr.bf16.mxu0 0
      %429 = vmatpush1.bf16.msra.mxu0 %v374
      %430 = vmatprep.subr.bf16.mxu0 0
      %431 = vmatpush1.bf16.msra.mxu0 %v375
      %432 = vmatprep.subr.bf16.mxu0 0
      %433 = vmatpush1.bf16.msra.mxu0 %v376
      %434 = vmatprep.subr.bf16.mxu0 0
      %435 = vmatpush1.bf16.msra.mxu0 %v377
      %436 = vmatprep.subr.bf16.mxu0 0
      %437 = vmatpush1.bf16.msra.mxu0 %v378
      %438 = vmatprep.subr.bf16.mxu0 0
      %439 = vmatpush1.bf16.msra.mxu0 %v379
      %440 = vmatprep.subr.bf16.mxu0 0
      %441 = vmatpush1.bf16.msra.mxu0 %v380
      %442 = vmatprep.subr.bf16.mxu0 0
      %443 = vmatpush1.bf16.msra.mxu0 %v381
      %444 = vmatprep.subr.bf16.mxu0 0
      %445 = vmatpush1.bf16.msra.mxu0 %v382
      %446 = vmatprep.subr.bf16.mxu0 0
      %447 = vmatpush1.bf16.msra.mxu0 %v383
      %448 = vmatprep.mubr.bf16.mxu0 %v222
      %449 = vmatmul.mubr.bf16.gmra.mrb[0].mxu0 %v221
      %v450 = vpop.f32.mrb[0].mxu0
      %v451 = vadd.f32 0.0, %v450
      %v452 = vpop.f32.mrb[0].mxu0
      %v453 = vpop.f32.mrb[0].mxu0
      %v454 = vadd.f32 0.0, %v453
      %v455 = vpop.f32.mrb[0].mxu0
      %456 = vdwg.mxu0
      %457 = vmatprep.subr.bf16.mxu0 0
      %458 = vmatpush1.bf16.msra.mxu0 %v384
      %459 = vmatprep.subr.bf16.mxu0 0
      %460 = vmatpush1.bf16.msra.mxu0 %v385
      %461 = vmatprep.subr.bf16.mxu0 0
      %462 = vmatpush1.bf16.msra.mxu0 %v386
      %463 = vmatprep.subr.bf16.mxu0 0
      %464 = vmatpush1.bf16.msra.mxu0 %v387
      %465 = vmatprep.subr.bf16.mxu0 0
      %466 = vmatpush1.bf16.msra.mxu0 %v388
      %467 = vmatprep.subr.bf16.mxu0 0
      %468 = vmatpush1.bf16.msra.mxu0 %v389
      %469 = vmatprep.subr.bf16.mxu0 0
      %470 = vmatpush1.bf16.msra.mxu0 %v390
      %471 = vmatprep.subr.bf16.mxu0 0
      %472 = vmatpush1.bf16.msra.mxu0 %v391
      %473 = vmatprep.subr.bf16.mxu0 0
      %474 = vmatpush1.bf16.msra.mxu0 0
      %475 = vmatprep.subr.bf16.mxu0 0
      %476 = vmatpush1.bf16.msra.mxu0 0
      %477 = vmatprep.subr.bf16.mxu0 0
      %478 = vmatpush1.bf16.msra.mxu0 0
      %479 = vmatprep.subr.bf16.mxu0 0
      %480 = vmatpush1.bf16.msra.mxu0 0
      %481 = vmatprep.subr.bf16.mxu0 0
      %482 = vmatpush1.bf16.msra.mxu0 0
      %483 = vmatprep.subr.bf16.mxu0 0
      %484 = vmatpush1.bf16.msra.mxu0 0
      %485 = vmatprep.subr.bf16.mxu0 0
      %486 = vmatpush1.bf16.msra.mxu0 0
      %487 = vmatprep.subr.bf16.mxu0 0
      %488 = vmatpush1.bf16.msra.mxu0 0
      %489 = vmatprep.mubr.bf16.mxu0 0
      %490 = vmatmul.mubr.bf16.gmra.mrb[0].mxu0 %v223
      %v491 = vpop.f32.mrb[0].mxu0
      %v492 = vadd.f32 %v451, %v491
      %v493 = vpop.f32.mrb[0].mxu0
      %v494 = vpop.f32.mrb[0].mxu0
      %v495 = vadd.f32 %v454, %v494
      %v496 = vpop.f32.mrb[0].mxu0
      %497 = vdwg.mxu0
      %v498 = vlaneseq
      %v499 = vshrl.u32 %v498, 7
      %v500 = vsub.s32 0, %v499
      %v501 = vrot.slane %v201, %v500
      %v502 = vmul.f32 %v492, %v501
      %v503 = vmul.f32 %v495, %v501
      %v504 = vlaneseq
      %v505 = vshrl.u32 %v504, 7
      %v506 = vsub.s32 0, %v505
      %v507 = vrot.slane %v202, %v506
      %v508 = vadd.f32 %v502, %v507
      %v509 = vadd.f32 %v503, %v507
      %v510 = vmax.f32 %v508, 0.0
      %v511 = vmax.f32 %v509, 0.0
      %v514 = vrot.slane %v510, 7
      %v515 = vrot.slane %v511, 7
      %v516 = vsel %vm207, %v514, %v515
      %v519 = vsel %vm207, 0.0, %v514
      %v520 = vrot.slane %v510, 1
      %v521 = vrot.slane %v511, 1
      %v522 = vsel %vm214, %v520, %v521
      %v525 = vsel %vm214, %v521, 0.0
      %v526 = vpack.c.bf16 %v516, %v519
      %v527 = vpack.c.bf16 %v511, %v510
      %v528 = vpack.c.bf16 %v525, %v522
      %v529 = vld [vmem:[%s2] sm:$0xf]
      %v530 = vld [vmem:[%s2 + $0x4] sm:$0xf]
      %v531 = vld [vmem:[%s2 + $0x8] sm:$0xf]
      %v532 = vld [vmem:[%s2 + $0xc] sm:$0xf]
      %v533 = vld [vmem:[%s2 + $0x10] sm:$0xf]
      %v534 = vld [vmem:[%s2 + $0x14] sm:$0xf]
      %v535 = vld [vmem:[%s2 + $0x18] sm:$0xf]
      %v536 = vld [vmem:[%s2 + $0x1c] sm:$0xf]
      %v537 = vld [vmem:[%s2 + $0x20] sm:$0xf]
      %v538 = vld [vmem:[%s2 + $0x24] sm:$0xf]
      %v539 = vld [vmem:[%s2 + $0x28] sm:$0xf]
      %v540 = vld [vmem:[%s2 + $0x2c] sm:$0xf]
      %v541 = vld [vmem:[%s2 + $0x30] sm:$0xf]
      %v542 = vld [vmem:[%s2 + $0x34] sm:$0xf]
      %v543 = vld [vmem:[%s2 + $0x38] sm:$0xf]
      %v544 = vld [vmem:[%s2 + $0x3c] sm:$0xf]
      %v545 = vld [vmem:[%s2 + $0x40] sm:$0xf]
      %v546 = vld [vmem:[%s2 + $0x44] sm:$0xf]
      %v547 = vld [vmem:[%s2 + $0x48] sm:$0xf]
      %v548 = vld [vmem:[%s2 + $0x4c] sm:$0xf]
      %v549 = vld [vmem:[%s2 + $0x50] sm:$0xf]
      %v550 = vld [vmem:[%s2 + $0x54] sm:$0xf]
      %v551 = vld [vmem:[%s2 + $0x58] sm:$0xf]
      %v552 = vld [vmem:[%s2 + $0x5c] sm:$0xf]
      %v553 = vld [vmem:[%s2 + $0x60] sm:$0xf]
      %v554 = vld [vmem:[%s2 + $0x64] sm:$0xf]
      %v555 = vld [vmem:[%s2 + $0x68] sm:$0xf]
      %v556 = vld [vmem:[%s2 + $0x6c] sm:$0xf]
      %v557 = vld [vmem:[%s2 + $0x70] sm:$0xf]
      %v558 = vld [vmem:[%s2 + $0x74] sm:$0xf]
      %v559 = vld [vmem:[%s2 + $0x78] sm:$0xf]
      %v560 = vld [vmem:[%s2 + $0x7c] sm:$0xf]
      %v561 = vld [vmem:[%s2 + $0x80] sm:$0xf]
      %v562 = vld [vmem:[%s2 + $0x84] sm:$0xf]
      %v563 = vld [vmem:[%s2 + $0x88] sm:$0xf]
      %v564 = vld [vmem:[%s2 + $0x8c] sm:$0xf]
      %v565 = vld [vmem:[%s2 + $0x90] sm:$0xf]
      %v566 = vld [vmem:[%s2 + $0x94] sm:$0xf]
      %v567 = vld [vmem:[%s2 + $0x98] sm:$0xf]
      %v568 = vld [vmem:[%s2 + $0x9c] sm:$0xf]
      %v569 = vld [vmem:[%s2 + $0xa0] sm:$0xf]
      %v570 = vld [vmem:[%s2 + $0xa4] sm:$0xf]
      %v571 = vld [vmem:[%s2 + $0xa8] sm:$0xf]
      %v572 = vld [vmem:[%s2 + $0xac] sm:$0xf]
      %v573 = vld [vmem:[%s2 + $0xb0] sm:$0xf]
      %v574 = vld [vmem:[%s2 + $0xb4] sm:$0xf]
      %v575 = vld [vmem:[%s2 + $0xb8] sm:$0xf]
      %v576 = vld [vmem:[%s2 + $0xbc] sm:$0xf]
      %v625 = vunpack.c.l.b16 %v529
      %v626 = vunpack.c.l.b16 %v530
      %v627 = vunpack.c.l.b16 %v531
      %v628 = vunpack.c.l.b16 %v532
      %v629 = vunpack.c.l.b16 %v533
      %v630 = vunpack.c.l.b16 %v534
      %v631 = vunpack.c.l.b16 %v535
      %v632 = vunpack.c.l.b16 %v536
      %v633 = vunpack.c.l.b16 %v537
      %v634 = vunpack.c.l.b16 %v538
      %v635 = vunpack.c.l.b16 %v539
      %v636 = vunpack.c.l.b16 %v540
      %v637 = vunpack.c.l.b16 %v541
      %v638 = vunpack.c.l.b16 %v542
      %v639 = vunpack.c.l.b16 %v543
      %v640 = vunpack.c.l.b16 %v544
      %v641 = vunpack.c.l.b16 %v545
      %v642 = vunpack.c.l.b16 %v546
      %v643 = vunpack.c.l.b16 %v547
      %v644 = vunpack.c.l.b16 %v548
      %v645 = vunpack.c.l.b16 %v549
      %v646 = vunpack.c.l.b16 %v550
      %v647 = vunpack.c.l.b16 %v551
      %v648 = vunpack.c.l.b16 %v552
      %v649 = vunpack.c.l.b16 %v553
      %v650 = vunpack.c.l.b16 %v554
      %v651 = vunpack.c.l.b16 %v555
      %v652 = vunpack.c.l.b16 %v556
      %v653 = vunpack.c.l.b16 %v557
      %v654 = vunpack.c.l.b16 %v558
      %v655 = vunpack.c.l.b16 %v559
      %v656 = vunpack.c.l.b16 %v560
      %v657 = vunpack.c.l.b16 %v561
      %v658 = vunpack.c.l.b16 %v562
      %v659 = vunpack.c.l.b16 %v563
      %v660 = vunpack.c.l.b16 %v564
      %v661 = vunpack.c.l.b16 %v565
      %v662 = vunpack.c.l.b16 %v566
      %v663 = vunpack.c.l.b16 %v567
      %v664 = vunpack.c.l.b16 %v568
      %v665 = vunpack.c.l.b16 %v569
      %v666 = vunpack.c.l.b16 %v570
      %v667 = vunpack.c.l.b16 %v571
      %v668 = vunpack.c.l.b16 %v572
      %v669 = vunpack.c.l.b16 %v573
      %v670 = vunpack.c.l.b16 %v574
      %v671 = vunpack.c.l.b16 %v575
      %v672 = vunpack.c.l.b16 %v576
      %v673 = vpack.c.b16 %v626, %v625
      %v674 = vpack.c.b16 %v628, %v627
      %v675 = vpack.c.b16 %v630, %v629
      %v676 = vpack.c.b16 %v632, %v631
      %v677 = vpack.c.b16 %v634, %v633
      %v678 = vpack.c.b16 %v636, %v635
      %v679 = vpack.c.b16 %v638, %v637
      %v680 = vpack.c.b16 %v640, %v639
      %v681 = vpack.c.b16 %v642, %v641
      %v682 = vpack.c.b16 %v644, %v643
      %v683 = vpack.c.b16 %v646, %v645
      %v684 = vpack.c.b16 %v648, %v647
      %v685 = vpack.c.b16 %v650, %v649
      %v686 = vpack.c.b16 %v652, %v651
      %v687 = vpack.c.b16 %v654, %v653
      %v688 = vpack.c.b16 %v656, %v655
      %v689 = vpack.c.b16 %v658, %v657
      %v690 = vpack.c.b16 %v660, %v659
      %v691 = vpack.c.b16 %v662, %v661
      %v692 = vpack.c.b16 %v664, %v663
      %v693 = vpack.c.b16 %v666, %v665
      %v694 = vpack.c.b16 %v668, %v667
      %v695 = vpack.c.b16 %v670, %v669
      %v696 = vpack.c.b16 %v672, %v671
      %721 = vmatprep.subr.bf16.mxu0 0
      %722 = vmatpush1.bf16.msra.mxu0 %v673
      %723 = vmatprep.subr.bf16.mxu0 0
      %724 = vmatpush1.bf16.msra.mxu0 %v674
      %725 = vmatprep.subr.bf16.mxu0 0
      %726 = vmatpush1.bf16.msra.mxu0 %v675
      %727 = vmatprep.subr.bf16.mxu0 0
      %728 = vmatpush1.bf16.msra.mxu0 %v676
      %729 = vmatprep.subr.bf16.mxu0 0
      %730 = vmatpush1.bf16.msra.mxu0 %v677
      %731 = vmatprep.subr.bf16.mxu0 0
      %732 = vmatpush1.bf16.msra.mxu0 %v678
      %733 = vmatprep.subr.bf16.mxu0 0
      %734 = vmatpush1.bf16.msra.mxu0 %v679
      %735 = vmatprep.subr.bf16.mxu0 0
      %736 = vmatpush1.bf16.msra.mxu0 %v680
      %737 = vmatprep.subr.bf16.mxu0 0
      %738 = vmatpush1.bf16.msra.mxu0 %v681
      %739 = vmatprep.subr.bf16.mxu0 0
      %740 = vmatpush1.bf16.msra.mxu0 %v682
      %741 = vmatprep.subr.bf16.mxu0 0
      %742 = vmatpush1.bf16.msra.mxu0 %v683
      %743 = vmatprep.subr.bf16.mxu0 0
      %744 = vmatpush1.bf16.msra.mxu0 %v684
      %745 = vmatprep.subr.bf16.mxu0 0
      %746 = vmatpush1.bf16.msra.mxu0 %v685
      %747 = vmatprep.subr.bf16.mxu0 0
      %748 = vmatpush1.bf16.msra.mxu0 %v686
      %749 = vmatprep.subr.bf16.mxu0 0
      %750 = vmatpush1.bf16.msra.mxu0 %v687
      %751 = vmatprep.subr.bf16.mxu0 0
      %752 = vmatpush1.bf16.msra.mxu0 %v688
      %753 = vmatprep.mubr.bf16.mxu0 %v527
      %754 = vmatmul.mubr.bf16.gmra.mrb[0].mxu0 %v526
      %v755 = vpop.f32.mrb[0].mxu0
      %v756 = vadd.f32 0.0, %v755
      %v757 = vpop.f32.mrb[0].mxu0
      %v758 = vpop.f32.mrb[0].mxu0
      %v759 = vadd.f32 0.0, %v758
      %v760 = vpop.f32.mrb[0].mxu0
      %761 = vdwg.mxu0
      %762 = vmatprep.subr.bf16.mxu0 0
      %763 = vmatpush1.bf16.msra.mxu0 %v689
      %764 = vmatprep.subr.bf16.mxu0 0
      %765 = vmatpush1.bf16.msra.mxu0 %v690
      %766 = vmatprep.subr.bf16.mxu0 0
      %767 = vmatpush1.bf16.msra.mxu0 %v691
      %768 = vmatprep.subr.bf16.mxu0 0
      %769 = vmatpush1.bf16.msra.mxu0 %v692
      %770 = vmatprep.subr.bf16.mxu0 0
      %771 = vmatpush1.bf16.msra.mxu0 %v693
      %772 = vmatprep.subr.bf16.mxu0 0
      %773 = vmatpush1.bf16.msra.mxu0 %v694
      %774 = vmatprep.subr.bf16.mxu0 0
      %775 = vmatpush1.bf16.msra.mxu0 %v695
      %776 = vmatprep.subr.bf16.mxu0 0
      %777 = vmatpush1.bf16.msra.mxu0 %v696
      %778 = vmatprep.subr.bf16.mxu0 0
      %779 = vmatpush1.bf16.msra.mxu0 0
      %780 = vmatprep.subr.bf16.mxu0 0
      %781 = vmatpush1.bf16.msra.mxu0 0
      %782 = vmatprep.subr.bf16.mxu0 0
      %783 = vmatpush1.bf16.msra.mxu0 0
      %784 = vmatprep.subr.bf16.mxu0 0
      %785 = vmatpush1.bf16.msra.mxu0 0
      %786 = vmatprep.subr.bf16.mxu0 0
      %787 = vmatpush1.bf16.msra.mxu0 0
      %788 = vmatprep.subr.bf16.mxu0 0
      %789 = vmatpush1.bf16.msra.mxu0 0
      %790 = vmatprep.subr.bf16.mxu0 0
      %791 = vmatpush1.bf16.msra.mxu0 0
      %792 = vmatprep.subr.bf16.mxu0 0
      %793 = vmatpush1.bf16.msra.mxu0 0
      %794 = vmatprep.mubr.bf16.mxu0 0
      %795 = vmatmul.mubr.bf16.gmra.mrb[0].mxu0 %v528
      %v796 = vpop.f32.mrb[0].mxu0
      %v797 = vadd.f32 %v756, %v796
      %v798 = vpop.f32.mrb[0].mxu0
      %v799 = vpop.f32.mrb[0].mxu0
      %v800 = vadd.f32 %v759, %v799
      %v801 = vpop.f32.mrb[0].mxu0
      %802 = vdwg.mxu0
      %v803 = vlaneseq
      %v804 = vshrl.u32 %v803, 7
      %v805 = vsub.s32 0, %v804
      %v806 = vrot.slane %v203, %v805
      %v807 = vmul.f32 %v797, %v806
      %v808 = vmul.f32 %v800, %v806
      %v809 = vlaneseq
      %v810 = vshrl.u32 %v809, 7
      %v811 = vsub.s32 0, %v810
      %v812 = vrot.slane %v204, %v811
      %v813 = vadd.f32 %v807, %v812
      %v814 = vadd.f32 %v808, %v812
      %v815 = vadd.f32 %v813, %v199
      %v816 = vadd.f32 %v814, %v200
      %v817 = vmax.f32 %v815, 0.0
      %v818 = vmax.f32 %v816, 0.0
      %819 = vst [vmem:[%s197] sm:$0xff] %v817
      %820 = vst [vmem:[%s197 + $0x8] sm:$0xff] %v818
      %p821 = scmp.lt.s32.totalorder %s15, 1
      %s822 = scalar_select %p821, %s15, 1
      %s823 = smul.addr %s822, 2
      %s824 = smul.addr %s823, 8
      %s825 = scalar_lea.vmem %s4, %s824
      // Predicated region
      $region37: #{resnet_block_forward.1} parent=35 // pred_check
        %p826 = pneg %p122
      $region38: #{resnet_block_forward.1} parent=35 // pred_check_branch
        %828 = sbr.rel (%p826) target = $region40
      $region39: #{resnet_block_forward.1} parent=35 // pred_region
        _
      $region40: #{resnet_block_forward.1} parent=35 // pred_fallthru
        _
    $region36: #{resnet_block_forward.1} parent=5 // pred_fallthru
      _
    %p829 = scmp.le.s32.totalorder 2, %s10
    // Predicated region
    $region41: #{resnet_block_forward.1} parent=5 // pred_check
      %p830 = pneg %p829
    $region42: #{resnet_block_forward.1} parent=5 // pred_check_branch
      %832 = sbr.rel (%p830) target = $region44
    $region43: #{resnet_block_forward.1} parent=5 // pred_region
      %s833 = ssub.s32 %s10, 2
      // Predicated region
      $region45: #{resnet_block_forward.1} parent=43 // pred_check
        %p834 = pneg %p128
      $region46: #{resnet_block_forward.1} parent=43 // pred_check_branch
        %836 = sbr.rel (%p834) target = $region48
      $region47: #{resnet_block_forward.1} parent=43 // pred_region
        %p837 = scmp.lt.s32.totalorder %s16, 1
        %s838 = scalar_select %p837, %s16, 1
        %s839 = smul.addr %s838, 2
        %s840 = smul.addr %s839, 8
        %s841 = scalar_lea.vmem %s4, %s840
      $region48: #{resnet_block_forward.1} parent=43 // pred_fallthru
        _
    $region44: #{resnet_block_forward.1} parent=5 // pred_fallthru
      _
  $region6: #{resnet_block_forward.1} parent=0 // loop_footer
    %s14 = sadd.s32 1, %s10
  $region7: #{resnet_block_forward.1} parent=0 // loop_footer_branch
    %9 = sbr.rel target = $region3
  $region8: #{resnet_block_forward.1} parent=0 // loop_exit
    _

</llo_original>
